<compile_context>
chip_gen: v5e
topology: v5e:2x2
jax: 0.10.0
libtpu: 0.0.40
codegen_flags: <defaults>
</compile_context>

<pallas_src>
import functools

import jax
import jax.numpy as jnp
from jax.experimental import pallas as pl
from jax.experimental.pallas import tpu as pltpu


def _round_up(x, m):
    return (x + m - 1) // m * m


def _crop_cnn1d_kernel(x_ref, w2_ref, bconv_ref, wfc_ref, bfc_ref, out_ref, *,
                       l_out, chan, ck, compute_dtype):
    # x_ref:     (tb, L*C)  channel-minor input block (compute_dtype)
    # w2_ref:    (C*K, F)   conv weight flattened over (k, c) (compute_dtype)
    # bconv_ref: (1, F)     float32
    # wfc_ref:   (F, NCp)   fc weight * (1/l_out), classes zero-padded (compute_dtype)
    # bfc_ref:   (1, NCp)   float32
    # out_ref:   (tb, NCp)  float32
    w2 = w2_ref[...]
    bc = bconv_ref[...]                                    # hoisted out of the loop
    pooled = None
    for l in range(l_out):                                 # static trip count
        # Contiguous 42-wide lane slice of the channel-minor row == im2col patch at l.
        xl = x_ref[:, l * chan:l * chan + ck]              # (tb, C*K)
        chunk = jnp.dot(xl, w2, preferred_element_type=jnp.float32)    # (tb, F) f32
        chunk = jnp.maximum(chunk + bc, 0.0)               # conv bias + ReLU (f32 epilogue)
        pooled = chunk if pooled is None else pooled + chunk
    # AdaptiveAvgPool1d(1): the 1/l_out scale is folded into wfc.  Dropout = identity.
    out = jnp.dot(pooled.astype(compute_dtype), wfc_ref[...],
                  preferred_element_type=jnp.float32) + bfc_ref[...]
    out_ref[...] = out.astype(out_ref.dtype)


def crop_cnn1d_forward(x_flat, wconv, bconv, wfc, bfc, *, in_channels=6,
                       batch_tile=512, compute_dtype=jnp.bfloat16):
    """x_flat: (B, input_size). Returns (B, num_classes) float32."""
    B = x_flat.shape[0]
    L = x_flat.shape[1] // in_channels
    F, C, K = wconv.shape
    num_classes = wfc.shape[0]
    l_out = L - K + 1
    LC = L * C
    CK = C * K
    ncp = _round_up(max(num_classes, 128), 128)            # lane-dense output width

    # Batch tile: multiple of 8, large by default, but capped so nb >= 2 when B
    # allows (megacore on v7x + pipeline overlap).
    tb = _round_up(batch_tile, 8)
    if B > 8:
        tb = min(tb, _round_up(-(-B // 2), 8))
    tb = min(tb, _round_up(B, 8))
    b_pad = _round_up(B, tb)
    nb = b_pad // tb

    # ---- wrapper-side glue (single fused pass over the input; weights constant-fold) ----
    # Cast to compute dtype FIRST so the transposed copy is half-size in bf16, then
    # channel-minor layout y[b, l*C + c] = x[b, c, l], then pad the batch.
    x = (x_flat.astype(compute_dtype)
         .reshape(B, in_channels, L)
         .transpose(0, 2, 1)
         .reshape(B, LC))
    x = jnp.pad(x, ((0, b_pad - B), (0, 0)))

    # Conv weight (F, C, K) -> (K*C, F); conv bias kept f32 as a (1, F) slab.
    w2 = jnp.transpose(wconv, (2, 1, 0)).reshape(CK, F).astype(compute_dtype)
    bconv2 = bconv.reshape(1, F).astype(jnp.float32)
    # FC weight (NC, F) -> (F, NCp) with the 1/l_out pooling scale folded in (fold
    # in f32 before the compute-dtype cast); FC bias padded, f32.
    wfc_scaled = jnp.transpose(wfc, (1, 0)).astype(jnp.float32) * (1.0 / l_out)
    wfc_p = jnp.pad(wfc_scaled, ((0, 0), (0, ncp - num_classes))).astype(compute_dtype)
    bfc_p = jnp.pad(bfc.astype(jnp.float32), (0, ncp - num_classes)).reshape(1, ncp)

    kernel = functools.partial(_crop_cnn1d_kernel, l_out=l_out, chan=C, ck=CK,
                               compute_dtype=compute_dtype)

    out = pl.pallas_call(
        kernel,
        out_shape=jax.ShapeDtypeStruct((b_pad, ncp), jnp.float32),
        grid=(nb,),
        in_specs=[
            pl.BlockSpec((tb, LC), lambda i: (i, 0)),       # raw channel-minor input tile
            pl.BlockSpec((CK, F), lambda i: (0, 0)),        # conv weight (resident)
            pl.BlockSpec((1, F), lambda i: (0, 0)),         # conv bias
            pl.BlockSpec((F, ncp), lambda i: (0, 0)),       # fc weight (lane-padded, scaled)
            pl.BlockSpec((1, ncp), lambda i: (0, 0)),       # fc bias
        ],
        out_specs=pl.BlockSpec((tb, ncp), lambda i: (i, 0)),
        compiler_params=pltpu.CompilerParams(
            dimension_semantics=("parallel",)),             # both TCs on v7x when nb >= 2
    )(x, w2, bconv2, wfc_p, bfc_p)

    return out[:B, :num_classes]


if __name__ == "__main__":
    # Small shapes consistent with the module: input_size = 6 * 16 = 96
    B = 2
    IN_CHANNELS = 6
    L = 16
    INPUT_SIZE = IN_CHANNELS * L
    CONV_FILTERS = 64
    KERNEL_SIZE = 7
    NUM_CLASSES = 4

    key = jax.random.PRNGKey(0)
    kx, kw1, kb1, kw2, kb2 = jax.random.split(key, 5)

    # Deterministic parameter init (PyTorch-style uniform bounds).
    conv_bound = 1.0 / (IN_CHANNELS * KERNEL_SIZE) ** 0.5
    wconv = jax.random.uniform(kw1, (CONV_FILTERS, IN_CHANNELS, KERNEL_SIZE),
                               minval=-conv_bound, maxval=conv_bound, dtype=jnp.float32)
    bconv = jax.random.uniform(kb1, (CONV_FILTERS,),
                               minval=-conv_bound, maxval=conv_bound, dtype=jnp.float32)
    fc_bound = 1.0 / CONV_FILTERS ** 0.5
    wfc = jax.random.uniform(kw2, (NUM_CLASSES, CONV_FILTERS),
                             minval=-fc_bound, maxval=fc_bound, dtype=jnp.float32)
    bfc = jax.random.uniform(kb2, (NUM_CLASSES,),
                             minval=-fc_bound, maxval=fc_bound, dtype=jnp.float32)

    x = jax.random.normal(kx, (B, INPUT_SIZE), dtype=jnp.float32)

    # Pure-JAX reference of the same math (full precision).
    xr = x.reshape(B, IN_CHANNELS, L)
    conv_ref = jax.lax.conv_general_dilated(
        xr, wconv, window_strides=(1,), padding="VALID",
        dimension_numbers=("NCH", "OIH", "NCH"),
        precision=jax.lax.Precision.HIGHEST) + bconv[None, :, None]
    pooled_ref = jnp.maximum(conv_ref, 0.0).mean(axis=-1)
    ref = jnp.dot(pooled_ref, wfc.T, precision=jax.lax.Precision.HIGHEST) + bfc[None, :]

    # Default path: bf16 MXU operands, f32 accumulation + f32 epilogue.
    out_bf16 = jax.block_until_ready(crop_cnn1d_forward(x, wconv, bconv, wfc, bfc))
    assert out_bf16.shape == (B, NUM_CLASSES)
    assert jnp.allclose(out_bf16, ref, atol=3e-2, rtol=3e-2)

    # Full-f32 path (exact-ish check).
    out_f32 = jax.block_until_ready(
        crop_cnn1d_forward(x, wconv, bconv, wfc, bfc, compute_dtype=jnp.float32))
    assert out_f32.shape == (B, NUM_CLASSES)
    assert jnp.allclose(out_f32, ref, atol=1e-4, rtol=1e-4)

    print("KERNEL_OK")
</pallas_src>

<mosaic_0001>
module attributes {stable_mosaic.version = 11 : i64} {
  func.func @_crop_cnn1d_kernel(%arg0: i32, %arg1: memref<8x96xbf16, #tpu.memory_space<vmem>>, %arg2: memref<42x64xbf16, #tpu.memory_space<vmem>>, %arg3: memref<1x64xf32, #tpu.memory_space<vmem>>, %arg4: memref<64x128xbf16, #tpu.memory_space<vmem>>, %arg5: memref<1x128xf32, #tpu.memory_space<vmem>>, %arg6: memref<8x128xf32, #tpu.memory_space<vmem>>) attributes {dimension_semantics = [#tpu.dimension_semantics<parallel>], iteration_bounds = array<i64: 1>, scalar_prefetch = 0 : i64, scratch_operands = 0 : i64, tpu.core_type = #tpu.core_type<tc>, window_params = [{transform_indices = @transform_0, window_bounds = array<i64: 8, 96>}, {pipeline_mode = #tpu.pipeline_mode<synchronous>, transform_indices = @transform_1, window_bounds = array<i64: 42, 64>}, {pipeline_mode = #tpu.pipeline_mode<synchronous>, transform_indices = @transform_2, window_bounds = array<i64: 1, 64>}, {pipeline_mode = #tpu.pipeline_mode<synchronous>, transform_indices = @transform_3, window_bounds = array<i64: 64, 128>}, {pipeline_mode = #tpu.pipeline_mode<synchronous>, transform_indices = @transform_4, window_bounds = array<i64: 1, 128>}, {transform_indices = @transform_5, window_bounds = array<i64: 8, 128>}]} {
    %c0 = arith.constant 0 : index
    %c0_0 = arith.constant 0 : index
    %0 = vector.load %arg2[%c0, %c0_0] : memref<42x64xbf16, #tpu.memory_space<vmem>>, vector<42x64xbf16>
    %c0_1 = arith.constant 0 : index
    %c0_2 = arith.constant 0 : index
    %1 = vector.load %arg3[%c0_1, %c0_2] : memref<1x64xf32, #tpu.memory_space<vmem>>, vector<1x64xf32>
    %c0_3 = arith.constant 0 : index
    %c0_4 = arith.constant 0 : index
    %2 = vector.load %arg1[%c0_3, %c0_4] : memref<8x96xbf16, #tpu.memory_space<vmem>>, vector<8x42xbf16>
    %cst = arith.constant dense<0.000000e+00> : vector<8x64xf32>
    %3 = tpu.matmul %2, %0, %cst {dimension_numbers = #tpu.dot_dimension_numbers<[1], [0], [0], [1], [0, 0, 1, 1], [], []>} : vector<8x42xbf16>, vector<42x64xbf16>, vector<8x64xf32> -> vector<8x64xf32>
    %4 = vector.broadcast %1 : vector<1x64xf32> to vector<8x64xf32>
    %5 = arith.addf %3, %4 : vector<8x64xf32>
    %cst_5 = arith.constant 0.000000e+00 : f32
    %6 = vector.broadcast %cst_5 : f32 to vector<8x64xf32>
    %7 = arith.maximumf %5, %6 : vector<8x64xf32>
    %c0_6 = arith.constant 0 : index
    %c6 = arith.constant 6 : index
    %8 = vector.load %arg1[%c0_6, %c6] : memref<8x96xbf16, #tpu.memory_space<vmem>>, vector<8x42xbf16>
    %cst_7 = arith.constant dense<0.000000e+00> : vector<8x64xf32>
    %9 = tpu.matmul %8, %0, %cst_7 {dimension_numbers = #tpu.dot_dimension_numbers<[1], [0], [0], [1], [0, 0, 1, 1], [], []>} : vector<8x42xbf16>, vector<42x64xbf16>, vector<8x64xf32> -> vector<8x64xf32>
    %10 = vector.broadcast %1 : vector<1x64xf32> to vector<8x64xf32>
    %11 = arith.addf %9, %10 : vector<8x64xf32>
    %cst_8 = arith.constant 0.000000e+00 : f32
    %12 = vector.broadcast %cst_8 : f32 to vector<8x64xf32>
    %13 = arith.maximumf %11, %12 : vector<8x64xf32>
    %14 = arith.addf %7, %13 : vector<8x64xf32>
    %c0_9 = arith.constant 0 : index
    %c12 = arith.constant 12 : index
    %15 = vector.load %arg1[%c0_9, %c12] : memref<8x96xbf16, #tpu.memory_space<vmem>>, vector<8x42xbf16>
    %cst_10 = arith.constant dense<0.000000e+00> : vector<8x64xf32>
    %16 = tpu.matmul %15, %0, %cst_10 {dimension_numbers = #tpu.dot_dimension_numbers<[1], [0], [0], [1], [0, 0, 1, 1], [], []>} : vector<8x42xbf16>, vector<42x64xbf16>, vector<8x64xf32> -> vector<8x64xf32>
    %17 = vector.broadcast %1 : vector<1x64xf32> to vector<8x64xf32>
    %18 = arith.addf %16, %17 : vector<8x64xf32>
    %cst_11 = arith.constant 0.000000e+00 : f32
    %19 = vector.broadcast %cst_11 : f32 to vector<8x64xf32>
    %20 = arith.maximumf %18, %19 : vector<8x64xf32>
    %21 = arith.addf %14, %20 : vector<8x64xf32>
    %c0_12 = arith.constant 0 : index
    %c18 = arith.constant 18 : index
    %22 = vector.load %arg1[%c0_12, %c18] : memref<8x96xbf16, #tpu.memory_space<vmem>>, vector<8x42xbf16>
    %cst_13 = arith.constant dense<0.000000e+00> : vector<8x64xf32>
    %23 = tpu.matmul %22, %0, %cst_13 {dimension_numbers = #tpu.dot_dimension_numbers<[1], [0], [0], [1], [0, 0, 1, 1], [], []>} : vector<8x42xbf16>, vector<42x64xbf16>, vector<8x64xf32> -> vector<8x64xf32>
    %24 = vector.broadcast %1 : vector<1x64xf32> to vector<8x64xf32>
    %25 = arith.addf %23, %24 : vector<8x64xf32>
    %cst_14 = arith.constant 0.000000e+00 : f32
    %26 = vector.broadcast %cst_14 : f32 to vector<8x64xf32>
    %27 = arith.maximumf %25, %26 : vector<8x64xf32>
    %28 = arith.addf %21, %27 : vector<8x64xf32>
    %c0_15 = arith.constant 0 : index
    %c24 = arith.constant 24 : index
    %29 = vector.load %arg1[%c0_15, %c24] : memref<8x96xbf16, #tpu.memory_space<vmem>>, vector<8x42xbf16>
    %cst_16 = arith.constant dense<0.000000e+00> : vector<8x64xf32>
    %30 = tpu.matmul %29, %0, %cst_16 {dimension_numbers = #tpu.dot_dimension_numbers<[1], [0], [0], [1], [0, 0, 1, 1], [], []>} : vector<8x42xbf16>, vector<42x64xbf16>, vector<8x64xf32> -> vector<8x64xf32>
    %31 = vector.broadcast %1 : vector<1x64xf32> to vector<8x64xf32>
    %32 = arith.addf %30, %31 : vector<8x64xf32>
    %cst_17 = arith.constant 0.000000e+00 : f32
    %33 = vector.broadcast %cst_17 : f32 to vector<8x64xf32>
    %34 = arith.maximumf %32, %33 : vector<8x64xf32>
    %35 = arith.addf %28, %34 : vector<8x64xf32>
    %c0_18 = arith.constant 0 : index
    %c30 = arith.constant 30 : index
    %36 = vector.load %arg1[%c0_18, %c30] : memref<8x96xbf16, #tpu.memory_space<vmem>>, vector<8x42xbf16>
    %cst_19 = arith.constant dense<0.000000e+00> : vector<8x64xf32>
    %37 = tpu.matmul %36, %0, %cst_19 {dimension_numbers = #tpu.dot_dimension_numbers<[1], [0], [0], [1], [0, 0, 1, 1], [], []>} : vector<8x42xbf16>, vector<42x64xbf16>, vector<8x64xf32> -> vector<8x64xf32>
    %38 = vector.broadcast %1 : vector<1x64xf32> to vector<8x64xf32>
    %39 = arith.addf %37, %38 : vector<8x64xf32>
    %cst_20 = arith.constant 0.000000e+00 : f32
    %40 = vector.broadcast %cst_20 : f32 to vector<8x64xf32>
    %41 = arith.maximumf %39, %40 : vector<8x64xf32>
    %42 = arith.addf %35, %41 : vector<8x64xf32>
    %c0_21 = arith.constant 0 : index
    %c36 = arith.constant 36 : index
    %43 = vector.load %arg1[%c0_21, %c36] : memref<8x96xbf16, #tpu.memory_space<vmem>>, vector<8x42xbf16>
    %cst_22 = arith.constant dense<0.000000e+00> : vector<8x64xf32>
    %44 = tpu.matmul %43, %0, %cst_22 {dimension_numbers = #tpu.dot_dimension_numbers<[1], [0], [0], [1], [0, 0, 1, 1], [], []>} : vector<8x42xbf16>, vector<42x64xbf16>, vector<8x64xf32> -> vector<8x64xf32>
    %45 = vector.broadcast %1 : vector<1x64xf32> to vector<8x64xf32>
    %46 = arith.addf %44, %45 : vector<8x64xf32>
    %cst_23 = arith.constant 0.000000e+00 : f32
    %47 = vector.broadcast %cst_23 : f32 to vector<8x64xf32>
    %48 = arith.maximumf %46, %47 : vector<8x64xf32>
    %49 = arith.addf %42, %48 : vector<8x64xf32>
    %c0_24 = arith.constant 0 : index
    %c42 = arith.constant 42 : index
    %50 = vector.load %arg1[%c0_24, %c42] : memref<8x96xbf16, #tpu.memory_space<vmem>>, vector<8x42xbf16>
    %cst_25 = arith.constant dense<0.000000e+00> : vector<8x64xf32>
    %51 = tpu.matmul %50, %0, %cst_25 {dimension_numbers = #tpu.dot_dimension_numbers<[1], [0], [0], [1], [0, 0, 1, 1], [], []>} : vector<8x42xbf16>, vector<42x64xbf16>, vector<8x64xf32> -> vector<8x64xf32>
    %52 = vector.broadcast %1 : vector<1x64xf32> to vector<8x64xf32>
    %53 = arith.addf %51, %52 : vector<8x64xf32>
    %cst_26 = arith.constant 0.000000e+00 : f32
    %54 = vector.broadcast %cst_26 : f32 to vector<8x64xf32>
    %55 = arith.maximumf %53, %54 : vector<8x64xf32>
    %56 = arith.addf %49, %55 : vector<8x64xf32>
    %c0_27 = arith.constant 0 : index
    %c48 = arith.constant 48 : index
    %57 = vector.load %arg1[%c0_27, %c48] : memref<8x96xbf16, #tpu.memory_space<vmem>>, vector<8x42xbf16>
    %cst_28 = arith.constant dense<0.000000e+00> : vector<8x64xf32>
    %58 = tpu.matmul %57, %0, %cst_28 {dimension_numbers = #tpu.dot_dimension_numbers<[1], [0], [0], [1], [0, 0, 1, 1], [], []>} : vector<8x42xbf16>, vector<42x64xbf16>, vector<8x64xf32> -> vector<8x64xf32>
    %59 = vector.broadcast %1 : vector<1x64xf32> to vector<8x64xf32>
    %60 = arith.addf %58, %59 : vector<8x64xf32>
    %cst_29 = arith.constant 0.000000e+00 : f32
    %61 = vector.broadcast %cst_29 : f32 to vector<8x64xf32>
    %62 = arith.maximumf %60, %61 : vector<8x64xf32>
    %63 = arith.addf %56, %62 : vector<8x64xf32>
    %c0_30 = arith.constant 0 : index
    %c54 = arith.constant 54 : index
    %64 = vector.load %arg1[%c0_30, %c54] : memref<8x96xbf16, #tpu.memory_space<vmem>>, vector<8x42xbf16>
    %cst_31 = arith.constant dense<0.000000e+00> : vector<8x64xf32>
    %65 = tpu.matmul %64, %0, %cst_31 {dimension_numbers = #tpu.dot_dimension_numbers<[1], [0], [0], [1], [0, 0, 1, 1], [], []>} : vector<8x42xbf16>, vector<42x64xbf16>, vector<8x64xf32> -> vector<8x64xf32>
    %66 = vector.broadcast %1 : vector<1x64xf32> to vector<8x64xf32>
    %67 = arith.addf %65, %66 : vector<8x64xf32>
    %cst_32 = arith.constant 0.000000e+00 : f32
    %68 = vector.broadcast %cst_32 : f32 to vector<8x64xf32>
    %69 = arith.maximumf %67, %68 : vector<8x64xf32>
    %70 = arith.addf %63, %69 : vector<8x64xf32>
    %71 = arith.truncf %70 : vector<8x64xf32> to vector<8x64xbf16>
    %c0_33 = arith.constant 0 : index
    %c0_34 = arith.constant 0 : index
    %72 = vector.load %arg4[%c0_33, %c0_34] : memref<64x128xbf16, #tpu.memory_space<vmem>>, vector<64x128xbf16>
    %cst_35 = arith.constant dense<0.000000e+00> : vector<8x128xf32>
    %73 = tpu.matmul %71, %72, %cst_35 {dimension_numbers = #tpu.dot_dimension_numbers<[1], [0], [0], [1], [0, 0, 1, 1], [], []>} : vector<8x64xbf16>, vector<64x128xbf16>, vector<8x128xf32> -> vector<8x128xf32>
    %c0_36 = arith.constant 0 : index
    %c0_37 = arith.constant 0 : index
    %74 = vector.load %arg5[%c0_36, %c0_37] : memref<1x128xf32, #tpu.memory_space<vmem>>, vector<1x128xf32>
    %75 = vector.broadcast %74 : vector<1x128xf32> to vector<8x128xf32>
    %76 = arith.addf %73, %75 : vector<8x128xf32>
    %c0_38 = arith.constant 0 : index
    %c0_39 = arith.constant 0 : index
    %77 = vector.load %arg6[%c0_38, %c0_39] : memref<8x128xf32, #tpu.memory_space<vmem>>, vector<8x128xf32>
    tpu.vector_store %arg6[%c0_38, %c0_39], %76 {strides = array<i32>} : memref<8x128xf32, #tpu.memory_space<vmem>>, vector<8x128xf32>,
    return
  }
  func.func @transform_0(%arg0: i32) -> (i32, i32) {
    %c0_i32 = arith.constant 0 : i32
    %c0_i32_0 = arith.constant 0 : i32
    return %arg0, %c0_i32 : i32, i32
  }
  func.func @transform_1(%arg0: i32) -> (i32, i32) {
    %c0_i32 = arith.constant 0 : i32
    %c0_i32_0 = arith.constant 0 : i32
    %c0_i32_1 = arith.constant 0 : i32
    return %c0_i32, %c0_i32_0 : i32, i32
  }
  func.func @transform_2(%arg0: i32) -> (i32, i32) {
    %c0_i32 = arith.constant 0 : i32
    %c0_i32_0 = arith.constant 0 : i32
    %c0_i32_1 = arith.constant 0 : i32
    return %c0_i32, %c0_i32_0 : i32, i32
  }
  func.func @transform_3(%arg0: i32) -> (i32, i32) {
    %c0_i32 = arith.constant 0 : i32
    %c0_i32_0 = arith.constant 0 : i32
    %c0_i32_1 = arith.constant 0 : i32
    return %c0_i32, %c0_i32_0 : i32, i32
  }
  func.func @transform_4(%arg0: i32) -> (i32, i32) {
    %c0_i32 = arith.constant 0 : i32
    %c0_i32_0 = arith.constant 0 : i32
    %c0_i32_1 = arith.constant 0 : i32
    return %c0_i32, %c0_i32_0 : i32, i32
  }
  func.func @transform_5(%arg0: i32) -> (i32, i32) {
    %c0_i32 = arith.constant 0 : i32
    %c0_i32_0 = arith.constant 0 : i32
    return %arg0, %c0_i32 : i32, i32
  }
}

</mosaic_0001>

<llo_original>
// kernel: tpu_custom_call.1
$region0: #{tpu_custom_call.1}
  #allocation0 [shape = 'u32[]', space=smem, size = 0x4, offset = 0x4, fixed_abs, tag = 'smem constant byte address 0x4 - core index']
  #allocation1 [shape = 'u32[72,128]{1,0:T(1,128)}', space=vmem, size = 0x9000, scoped, tag = 'internal scratch']
  %s0 = inlined_call_operand.hbm [shape: bf16[8,96], index: 0, kind: input, shape index: {}]
  %s1 = inlined_call_operand.hbm [shape: bf16[42,64], index: 1, kind: input, shape index: {}]
  %s2 = inlined_call_operand.vmem [shape: f32[1,64], index: 2, kind: input, shape index: {}]
  %s3 = inlined_call_operand.hbm [shape: bf16[64,128], index: 3, kind: input, shape index: {}]
  %s4 = inlined_call_operand.vmem [shape: f32[1,128], index: 4, kind: input, shape index: {}]
  %s5 = inlined_call_operand.hbm [shape: f32[8,128], index: 5, kind: output, shape index: {}]
  %s6 = sld [smem:[#allocation0]]
  $region42: #{tpu_custom_call.1} parent=0
    _
  %s8 = ssub.s32 1, %s6
  %s9 = scalar_select 0, %s8, %s6
  $region1: #{tpu_custom_call.1} parent=0
    #allocation2 [shape = 'u8[2048]{0}', space=vmem, size = 0x800, scoped, tag = 'input window, operand 0, single buffered']
    #allocation3 [shape = 's32[1]{0}', space=sflag, size = 0x4, scoped, tag = 'scoped memory for tpu_custom_call.1']
    #allocation4 [shape = 's32[1]{0}', space=sflag, size = 0x4, scoped, tag = 'scoped memory for tpu_custom_call.1']
    #allocation5 [shape = 'u8[12288]{0}', space=vmem, size = 0x3000, scoped, tag = 'input window, operand 1, single buffered']
    #allocation6 [shape = 's32[1]{0}', space=sflag, size = 0x4, scoped, tag = 'scoped memory for tpu_custom_call.1']
    #allocation7 [shape = 'u8[16384]{0}', space=vmem, size = 0x4000, scoped, tag = 'input window, operand 3, single buffered']
    #allocation8 [shape = 'u8[4096]{0}', space=vmem, size = 0x1000, scoped, tag = 'output window, operand 0, single buffered']
    %10 = vsyncpa [#allocation3], 0
    %11 = vsyncpa [#allocation6], 0
    %12 = vsyncpa [#allocation4], 0
    // Predicated region
    $region2: #{tpu_custom_call.1} parent=1 // pred_check
      _
    $region3: #{tpu_custom_call.1} parent=1 // pred_check_branch
      %14 = sbr.rel (0) target = $region5
    $region4: #{tpu_custom_call.1} parent=1 // pred_region
      %16 = vsyncadd [#allocation3], 0
      %s18 = sshll.u32 %s0, 4
      %s19 = int_to_ptr.hbm [resolvable:$true] %s18
      %s20 = sshll.u32 [#allocation2], 4
      %s21 = int_to_ptr.vmem [resolvable:$true] %s20
      %23 = dma.hbm_to_vmem [thread:$0]  %s19, 64, %s21, [#allocation3]
    $region5: #{tpu_custom_call.1} parent=1 // pred_fallthru
      _
    // Predicated region
    $region6: #{tpu_custom_call.1} parent=1 // pred_check
      _
    $region7: #{tpu_custom_call.1} parent=1 // pred_check_branch
      %25 = sbr.rel (0) target = $region9
    $region8: #{tpu_custom_call.1} parent=1 // pred_region
      %27 = vsyncadd [#allocation6], 0
      %s28 = sshll.u32 %s1, 4
      %s29 = int_to_ptr.hbm [resolvable:$true] %s28
      %s30 = sshll.u32 [#allocation5], 4
      %s31 = int_to_ptr.vmem [resolvable:$true] %s30
      %36 = dma.hbm_to_vmem [thread:$0]  %s29, 384, %s31, [#allocation6], 64, 64, 4
    $region9: #{tpu_custom_call.1} parent=1 // pred_fallthru
      _
    // Predicated region
    $region10: #{tpu_custom_call.1} parent=1 // pred_check
      _
    $region11: #{tpu_custom_call.1} parent=1 // pred_check_branch
      %38 = sbr.rel (0) target = $region13
    $region12: #{tpu_custom_call.1} parent=1 // pred_region
      _
    $region13: #{tpu_custom_call.1} parent=1 // pred_fallthru
      _
    // Predicated region
    $region14: #{tpu_custom_call.1} parent=1 // pred_check
      _
    $region15: #{tpu_custom_call.1} parent=1 // pred_check_branch
      %40 = sbr.rel (0) target = $region17
    $region16: #{tpu_custom_call.1} parent=1 // pred_region
      %42 = vsyncadd [#allocation6], 0
      %s43 = sshll.u32 %s3, 4
      %s44 = int_to_ptr.hbm [resolvable:$true] %s43
      %s45 = sshll.u32 [#allocation7], 4
      %s46 = int_to_ptr.vmem [resolvable:$true] %s45
      %51 = dma.hbm_to_vmem [thread:$0]  %s44, 512, %s46, [#allocation6], 64, 64, 4
    $region17: #{tpu_custom_call.1} parent=1 // pred_fallthru
      _
    // Predicated region
    $region18: #{tpu_custom_call.1} parent=1 // pred_check
      _
    $region19: #{tpu_custom_call.1} parent=1 // pred_check_branch
      %53 = sbr.rel (0) target = $region21
    $region20: #{tpu_custom_call.1} parent=1 // pred_region
      _
    $region21: #{tpu_custom_call.1} parent=1 // pred_fallthru
      _
    // Predicated region
    $region22: #{tpu_custom_call.1} parent=1 // pred_check
      _
    $region23: #{tpu_custom_call.1} parent=1 // pred_check_branch
      %55 = sbr.rel (0) target = $region25
    $region24: #{tpu_custom_call.1} parent=1 // pred_region
      %57 = dma.done [#allocation3], 64
    $region25: #{tpu_custom_call.1} parent=1 // pred_fallthru
      _
    // Predicated region
    $region26: #{tpu_custom_call.1} parent=1 // pred_check
      _
    $region27: #{tpu_custom_call.1} parent=1 // pred_check_branch
      %59 = sbr.rel (0) target = $region29
    $region28: #{tpu_custom_call.1} parent=1 // pred_region
      %61 = dma.done [#allocation6], 384
    $region29: #{tpu_custom_call.1} parent=1 // pred_fallthru
      _
    // Predicated region
    $region30: #{tpu_custom_call.1} parent=1 // pred_check
      _
    $region31: #{tpu_custom_call.1} parent=1 // pred_check_branch
      %63 = sbr.rel (0) target = $region33
    $region32: #{tpu_custom_call.1} parent=1 // pred_region
      %65 = dma.done [#allocation6], 512
    $region33: #{tpu_custom_call.1} parent=1 // pred_fallthru
      _
    %v67 = vld [vmem:[#allocation5] sm:$0xf]
    %v68 = vld [vmem:[#allocation5 + $0x4] sm:$0xf]
    %v69 = vld [vmem:[#allocation5 + $0x8] sm:$0xf]
    %v70 = vld [vmem:[#allocation5 + $0xc] sm:$0xf]
    %v71 = vld [vmem:[#allocation5 + $0x10] sm:$0xf]
    %v72 = vld [vmem:[#allocation5 + $0x14] sm:$0x1]
    %v73 = vld [vmem:[%s2] sm:$0x1]
    %v74 = vld [vmem:[#allocation2] sm:$0xf]
    %v76 = vperm.slane %v73, 0
    %v84 = vunpack.c.l.b16 %v67
    %v85 = vunpack.c.l.b16 %v68
    %v86 = vunpack.c.l.b16 %v69
    %v87 = vunpack.c.l.b16 %v70
    %v88 = vunpack.c.l.b16 %v71
    %v89 = vunpack.c.l.b16 %v72
    %v90 = vpack.c.b16 %v85, %v84
    %v91 = vpack.c.b16 %v87, %v86
    %v92 = vpack.c.b16 %v89, %v88
    %vm95 = vcmask 343040
    %v97 = vsel %vm95, %v74, 0
    %vm99 = vcmask 1044480
    %v101 = vsel %vm99, %v92, 0
    %103 = vmatpush.bf16.msra.mxu0 0
    %104 = vmatpush.bf16.msra.mxu0 0
    %105 = vmatpush.bf16.msra.mxu0 0
    %106 = vmatpush.bf16.msra.mxu0 0
    %107 = vmatpush.bf16.msra.mxu0 0
    %108 = vmatpush.bf16.msra.mxu0 %v101
    %109 = vmatpush.bf16.msra.mxu0 %v91
    %110 = vmatpush.bf16.msra.mxu0 %v90
    %111 = vmatmul.bf16.gmra.mxu0 %v97
    %v112 = vpop.f32.mrf.mxu0
    %v113 = vadd.f32 %v76, %v112
    %v114 = vpop.f32.mrf.mxu0
    %115 = vdwg.mxu0
    %v116 = vmax.f32 %v113, 0.0
    %v118 = vunpack.c.l.b16 %v74
    %v119 = vpack.c.b16 %v118, %v118
    %120 = vrot.lane.b32.xlu0 %v119, 122
    %v121 = vpop.permute.xlu0 %120
    %v123 = vsel %vm95, %v121, 0
    %125 = vmatpush.bf16.msra.mxu0 0
    %126 = vmatpush.bf16.msra.mxu0 0
    %127 = vmatpush.bf16.msra.mxu0 0
    %128 = vmatpush.bf16.msra.mxu0 0
    %129 = vmatpush.bf16.msra.mxu0 0
    %130 = vmatpush.bf16.msra.mxu0 %v101
    %131 = vmatpush.bf16.msra.mxu0 %v91
    %132 = vmatpush.bf16.msra.mxu0 %v90
    %133 = vmatmul.bf16.gmra.mxu0 %v123
    %v134 = vpop.f32.mrf.mxu0
    %v135 = vadd.f32 %v76, %v134
    %v136 = vpop.f32.mrf.mxu0
    %137 = vdwg.mxu0
    %v138 = vmax.f32 %v135, 0.0
    %v139 = vadd.f32 %v116, %v138
    %140 = vrot.lane.b32.xlu0 %v119, 116
    %v141 = vpop.permute.xlu0 %140
    %v143 = vsel %vm95, %v141, 0
    %145 = vmatpush.bf16.msra.mxu0 0
    %146 = vmatpush.bf16.msra.mxu0 0
    %147 = vmatpush.bf16.msra.mxu0 0
    %148 = vmatpush.bf16.msra.mxu0 0
    %149 = vmatpush.bf16.msra.mxu0 0
    %150 = vmatpush.bf16.msra.mxu0 %v101
    %151 = vmatpush.bf16.msra.mxu0 %v91
    %152 = vmatpush.bf16.msra.mxu0 %v90
    %153 = vmatmul.bf16.gmra.mxu0 %v143
    %v154 = vpop.f32.mrf.mxu0
    %v155 = vadd.f32 %v76, %v154
    %v156 = vpop.f32.mrf.mxu0
    %157 = vdwg.mxu0
    %v158 = vmax.f32 %v155, 0.0
    %v159 = vadd.f32 %v139, %v158
    %160 = vrot.lane.b32.xlu0 %v119, 110
    %v161 = vpop.permute.xlu0 %160
    %v163 = vsel %vm95, %v161, 0
    %165 = vmatpush.bf16.msra.mxu0 0
    %166 = vmatpush.bf16.msra.mxu0 0
    %167 = vmatpush.bf16.msra.mxu0 0
    %168 = vmatpush.bf16.msra.mxu0 0
    %169 = vmatpush.bf16.msra.mxu0 0
    %170 = vmatpush.bf16.msra.mxu0 %v101
    %171 = vmatpush.bf16.msra.mxu0 %v91
    %172 = vmatpush.bf16.msra.mxu0 %v90
    %173 = vmatmul.bf16.gmra.mxu0 %v163
    %v174 = vpop.f32.mrf.mxu0
    %v175 = vadd.f32 %v76, %v174
    %v176 = vpop.f32.mrf.mxu0
    %177 = vdwg.mxu0
    %v178 = vmax.f32 %v175, 0.0
    %v179 = vadd.f32 %v159, %v178
    %180 = vrot.lane.b32.xlu0 %v119, 104
    %v181 = vpop.permute.xlu0 %180
    %v183 = vsel %vm95, %v181, 0
    %185 = vmatpush.bf16.msra.mxu0 0
    %186 = vmatpush.bf16.msra.mxu0 0
    %187 = vmatpush.bf16.msra.mxu0 0
    %188 = vmatpush.bf16.msra.mxu0 0
    %189 = vmatpush.bf16.msra.mxu0 0
    %190 = vmatpush.bf16.msra.mxu0 %v101
    %191 = vmatpush.bf16.msra.mxu0 %v91
    %192 = vmatpush.bf16.msra.mxu0 %v90
    %193 = vmatmul.bf16.gmra.mxu0 %v183
    %v194 = vpop.f32.mrf.mxu0
    %v195 = vadd.f32 %v76, %v194
    %v196 = vpop.f32.mrf.mxu0
    %197 = vdwg.mxu0
    %v198 = vmax.f32 %v195, 0.0
    %v199 = vadd.f32 %v179, %v198
    %200 = vrot.lane.b32.xlu0 %v119, 98
    %v201 = vpop.permute.xlu0 %200
    %v203 = vsel %vm95, %v201, 0
    %205 = vmatpush.bf16.msra.mxu0 0
    %206 = vmatpush.bf16.msra.mxu0 0
    %207 = vmatpush.bf16.msra.mxu0 0
    %208 = vmatpush.bf16.msra.mxu0 0
    %209 = vmatpush.bf16.msra.mxu0 0
    %210 = vmatpush.bf16.msra.mxu0 %v101
    %211 = vmatpush.bf16.msra.mxu0 %v91
    %212 = vmatpush.bf16.msra.mxu0 %v90
    %213 = vmatmul.bf16.gmra.mxu0 %v203
    %v214 = vpop.f32.mrf.mxu0
    %v215 = vadd.f32 %v76, %v214
    %v216 = vpop.f32.mrf.mxu0
    %217 = vdwg.mxu0
    %v218 = vmax.f32 %v215, 0.0
    %v219 = vadd.f32 %v199, %v218
    %220 = vrot.lane.b32.xlu0 %v119, 92
    %v221 = vpop.permute.xlu0 %220
    %v223 = vsel %vm95, %v221, 0
    %225 = vmatpush.bf16.msra.mxu0 0
    %226 = vmatpush.bf16.msra.mxu0 0
    %227 = vmatpush.bf16.msra.mxu0 0
    %228 = vmatpush.bf16.msra.mxu0 0
    %229 = vmatpush.bf16.msra.mxu0 0
    %230 = vmatpush.bf16.msra.mxu0 %v101
    %231 = vmatpush.bf16.msra.mxu0 %v91
    %232 = vmatpush.bf16.msra.mxu0 %v90
    %233 = vmatmul.bf16.gmra.mxu0 %v223
    %v234 = vpop.f32.mrf.mxu0
    %v235 = vadd.f32 %v76, %v234
    %v236 = vpop.f32.mrf.mxu0
    %237 = vdwg.mxu0
    %v238 = vmax.f32 %v235, 0.0
    %v239 = vadd.f32 %v219, %v238
    %240 = vrot.lane.b32.xlu0 %v119, 86
    %v241 = vpop.permute.xlu0 %240
    %v243 = vsel %vm95, %v241, 0
    %245 = vmatpush.bf16.msra.mxu0 0
    %246 = vmatpush.bf16.msra.mxu0 0
    %247 = vmatpush.bf16.msra.mxu0 0
    %248 = vmatpush.bf16.msra.mxu0 0
    %249 = vmatpush.bf16.msra.mxu0 0
    %250 = vmatpush.bf16.msra.mxu0 %v101
    %251 = vmatpush.bf16.msra.mxu0 %v91
    %252 = vmatpush.bf16.msra.mxu0 %v90
    %253 = vmatmul.bf16.gmra.mxu0 %v243
    %v254 = vpop.f32.mrf.mxu0
    %v255 = vadd.f32 %v76, %v254
    %v256 = vpop.f32.mrf.mxu0
    %257 = vdwg.mxu0
    %v258 = vmax.f32 %v255, 0.0
    %v259 = vadd.f32 %v239, %v258
    %260 = vrot.lane.b32.xlu0 %v119, 80
    %v261 = vpop.permute.xlu0 %260
    %v263 = vsel %vm95, %v261, 0
    %265 = vmatpush.bf16.msra.mxu0 0
    %266 = vmatpush.bf16.msra.mxu0 0
    %267 = vmatpush.bf16.msra.mxu0 0
    %268 = vmatpush.bf16.msra.mxu0 0
    %269 = vmatpush.bf16.msra.mxu0 0
    %270 = vmatpush.bf16.msra.mxu0 %v101
    %271 = vmatpush.bf16.msra.mxu0 %v91
    %272 = vmatpush.bf16.msra.mxu0 %v90
    %273 = vmatmul.bf16.gmra.mxu0 %v263
    %v274 = vpop.f32.mrf.mxu0
    %v275 = vadd.f32 %v76, %v274
    %v276 = vpop.f32.mrf.mxu0
    %277 = vdwg.mxu0
    %v278 = vmax.f32 %v275, 0.0
    %v279 = vadd.f32 %v259, %v278
    %280 = vrot.lane.b32.xlu0 %v119, 74
    %v281 = vpop.permute.xlu0 %280
    %v283 = vsel %vm95, %v281, 0
    %285 = vmatpush.bf16.msra.mxu0 0
    %286 = vmatpush.bf16.msra.mxu0 0
    %287 = vmatpush.bf16.msra.mxu0 0
    %288 = vmatpush.bf16.msra.mxu0 0
    %289 = vmatpush.bf16.msra.mxu0 0
    %290 = vmatpush.bf16.msra.mxu0 %v101
    %291 = vmatpush.bf16.msra.mxu0 %v91
    %292 = vmatpush.bf16.msra.mxu0 %v90
    %293 = vmatmul.bf16.gmra.mxu0 %v283
    %v294 = vpop.f32.mrf.mxu0
    %v295 = vadd.f32 %v76, %v294
    %v296 = vpop.f32.mrf.mxu0
    %297 = vdwg.mxu0
    %v298 = vmax.f32 %v295, 0.0
    %v299 = vadd.f32 %v279, %v298
    %v300 = vpack.c.bf16 %v299, %v299
    %v301 = vld [vmem:[#allocation7] sm:$0xf]
    %v302 = vld [vmem:[#allocation7 + $0x4] sm:$0xf]
    %v303 = vld [vmem:[#allocation7 + $0x8] sm:$0xf]
    %v304 = vld [vmem:[#allocation7 + $0xc] sm:$0xf]
    %v305 = vld [vmem:[#allocation7 + $0x10] sm:$0xf]
    %v306 = vld [vmem:[#allocation7 + $0x14] sm:$0xf]
    %v307 = vld [vmem:[#allocation7 + $0x18] sm:$0xf]
    %v308 = vld [vmem:[#allocation7 + $0x1c] sm:$0xf]
    %v309 = vld [vmem:[%s4] sm:$0x1]
    %v311 = vperm.slane %v309, 0
    %v321 = vunpack.c.l.b16 %v301
    %v322 = vunpack.c.l.b16 %v302
    %v323 = vunpack.c.l.b16 %v303
    %v324 = vunpack.c.l.b16 %v304
    %v325 = vunpack.c.l.b16 %v305
    %v326 = vunpack.c.l.b16 %v306
    %v327 = vunpack.c.l.b16 %v307
    %v328 = vunpack.c.l.b16 %v308
    %v329 = vpack.c.b16 %v322, %v321
    %v330 = vpack.c.b16 %v324, %v323
    %v331 = vpack.c.b16 %v326, %v325
    %v332 = vpack.c.b16 %v328, %v327
    %vm337 = vcmask 523264
    %v339 = vsel %vm337, %v300, 0
    %341 = vmatpush.bf16.msra.mxu0 0
    %342 = vmatpush.bf16.msra.mxu0 0
    %343 = vmatpush.bf16.msra.mxu0 0
    %344 = vmatpush.bf16.msra.mxu0 0
    %345 = vmatpush.bf16.msra.mxu0 %v332
    %346 = vmatpush.bf16.msra.mxu0 %v331
    %347 = vmatpush.bf16.msra.mxu0 %v330
    %348 = vmatpush.bf16.msra.mxu0 %v329
    %349 = vmatmul.bf16.gmra.mxu0 %v339
    %v350 = vpop.f32.mrf.mxu0
    %v351 = vadd.f32 %v311, %v350
    %v352 = vpop.f32.mrf.mxu0
    %353 = vdwg.mxu0
    %354 = vst [vmem:[#allocation8] sm:$0xff] %v351
    // Predicated region
    $region34: #{tpu_custom_call.1} parent=1 // pred_check
      _
    $region35: #{tpu_custom_call.1} parent=1 // pred_check_branch
      %356 = sbr.rel (0) target = $region37
    $region36: #{tpu_custom_call.1} parent=1 // pred_region
      %358 = vsyncadd [#allocation4], 0
      %s360 = sshll.u32 [#allocation8], 4
      %s361 = int_to_ptr.vmem [resolvable:$true] %s360
      %s362 = sshll.u32 %s5, 4
      %s363 = int_to_ptr.hbm [resolvable:$true] %s362
      %365 = dma.vmem_to_hbm [thread:$0]  %s361, 128, %s363, [#allocation4]
    $region37: #{tpu_custom_call.1} parent=1 // pred_fallthru
      _
    // Predicated region
    $region38: #{tpu_custom_call.1} parent=1 // pred_check
      _
    $region39: #{tpu_custom_call.1} parent=1 // pred_check_branch
      %367 = sbr.rel (0) target = $region41
    $region40: #{tpu_custom_call.1} parent=1 // pred_region
      %369 = dma.done [#allocation4], 128
    $region41: #{tpu_custom_call.1} parent=1 // pred_fallthru
      _
    %370 = vsyncpa [#allocation3], 1
    %371 = vsyncpa [#allocation6], 1
    %372 = vsyncpa [#allocation4], 1

</llo_original>
